<compile_context>
chip_gen: v7x
topology: tpu7x:2x2x1
jax: 0.10.0
libtpu: 0.0.40
codegen_flags: <defaults>
</compile_context>

<pallas_src>
import functools
import math

import jax
import jax.numpy as jnp
from jax.experimental import pallas as pl
from jax.experimental.pallas import tpu as pltpu


def _charbonnier_kernel(x_ref, y_ref, out_ref, acc_ref, *,
                        eps2, inner, n_tiles, tile_rows, acc_rows,
                        last_valid_rows, has_phantom):
    c = pl.program_id(0)          # parallel (core-split) axis
    i = pl.program_id(1)          # reduction axis ("arbitrary")
    block = c * inner + i

    @pl.when(i == 0)
    def _():
        acc_ref[...] = jnp.zeros_like(acc_ref)

    def _charb():
        d = x_ref[...].astype(jnp.float32) - y_ref[...].astype(jnp.float32)
        return jnp.sqrt(d * d + jnp.float32(eps2))

    def _accumulate(v):
        # (tile_rows,128) -> (tile_rows//acc_rows, acc_rows, 128) sum over axis 0:
        # acc_rows/8 independent vreg add chains, pure VPU, no cross-lane work.
        acc_ref[...] += v.reshape(tile_rows // acc_rows, acc_rows, 128).sum(axis=0)

    needs_row_mask = last_valid_rows != tile_rows     # static Python bool

    if needs_row_mask or has_phantom:
        # Interior tiles: plain path, zero masking overhead.
        if n_tiles > 1:
            @pl.when(block < n_tiles - 1)
            def _():
                _accumulate(_charb())

        # Last (possibly ragged) tile: mask OOB rows with a static row bound.
        @pl.when(block == n_tiles - 1)
        def _():
            v = _charb()
            if needs_row_mask:
                rid = jax.lax.broadcasted_iota(jnp.int32, (tile_rows, 128), 0)
                v = jnp.where(rid < last_valid_rows, v, jnp.float32(0.0))
            _accumulate(v)

        # block > n_tiles - 1: phantom step of an odd 2-way split -> contributes nothing.
    else:
        # Fully aligned case: no mask code emitted at all.
        _accumulate(_charb())

    # Write the per-core partial-sum slab once, on the last reduction step.
    @pl.when(i == pl.num_programs(1) - 1)
    def _():
        out_ref[...] = acc_ref[...]


def charbonnier_loss(x, y, eps=1e-3, *, tile_rows=4096):
    """Pallas TPU implementation of CharbonnierLoss.forward (returns f32 scalar)."""
    assert x.shape == y.shape, "x and y must have the same shape"
    n_elem = x.size
    assert n_elem > 0, "empty input"
    lanes = 128
    eps2 = float(eps) * float(eps)

    xf = jnp.ravel(x)
    yf = jnp.ravel(y)

    rows = n_elem // lanes
    tail = n_elem - rows * lanes            # < 128 trailing elements

    # Tail handled by a tiny XLA reduction (avoids any full-tensor pad copy).
    tail_sum = jnp.float32(0.0)
    if tail:
        dt = xf[rows * lanes:].astype(jnp.float32) - yf[rows * lanes:].astype(jnp.float32)
        tail_sum = jnp.sum(jnp.sqrt(dt * dt + jnp.float32(eps2)))

    if rows == 0:
        return tail_sum / jnp.float32(n_elem)

    if tail:
        # TODO(synk): this prefix slice still materializes one copy of the aligned
        # bulk; a manual-DMA (memory_space=pl.ANY) pipeline could read the original
        # unpadded buffer directly.
        xb = xf[: rows * lanes]
        yb = yf[: rows * lanes]
    else:
        xb, yb = xf, yf                      # zero-copy reshape path
    x2 = xb.reshape(rows, lanes)
    y2 = yb.reshape(rows, lanes)

    # Tile sizing: multiple of 8, never larger than rows (so only the standard
    # ragged boundary block can occur); rows < 8 uses a full-extent block.
    if rows < 8:
        tile_rows = rows
    else:
        tile_rows = max(8, (min(int(tile_rows), rows) // 8) * 8)
    acc_rows = math.gcd(tile_rows, 64)       # widened partial-sum slab (<= 64 rows)

    n_tiles = -(-rows // tile_rows)          # cdiv
    # Always split 2 ways when >= 2 tiles (both v7x TensorCores pull HBM).
    num_splits = 2 if n_tiles >= 2 else 1
    inner = -(-n_tiles // num_splits)        # cdiv
    has_phantom = (num_splits * inner) != n_tiles
    last_valid_rows = rows - (n_tiles - 1) * tile_rows

    if has_phantom:
        # Clamp the phantom step's block index so its DMA stays in bounds; the
        # kernel skips its compute entirely.
        in_map = lambda c, i: (jnp.minimum(c * inner + i, n_tiles - 1), 0)
    else:
        in_map = lambda c, i: (c * inner + i, 0)

    kernel = functools.partial(
        _charbonnier_kernel,
        eps2=eps2,
        inner=int(inner),
        n_tiles=int(n_tiles),
        tile_rows=int(tile_rows),
        acc_rows=int(acc_rows),
        last_valid_rows=int(last_valid_rows),
        has_phantom=bool(has_phantom),
    )

    partials = pl.pallas_call(
        kernel,
        out_shape=jax.ShapeDtypeStruct((num_splits * acc_rows, lanes), jnp.float32),
        grid_spec=pltpu.PrefetchScalarGridSpec(
            num_scalar_prefetch=0,
            grid=(num_splits, inner),
            in_specs=[
                pl.BlockSpec((tile_rows, lanes), in_map),
                pl.BlockSpec((tile_rows, lanes), in_map),
            ],
            # One (acc_rows,128) partial-sum slab per core split; resident
            # across the inner (reduction) axis.
            out_specs=pl.BlockSpec((acc_rows, lanes), lambda c, i: (c, 0)),
            scratch_shapes=[pltpu.VMEM((acc_rows, lanes), jnp.float32)],
        ),
        compiler_params=pltpu.CompilerParams(
            dimension_semantics=("parallel", "arbitrary"),
        ),
    )(x2, y2)

    # Tiny final reduction (<= 2*64*128 f32 + tail) done by XLA.
    return (jnp.sum(partials) + tail_sum) / jnp.float32(n_elem)


def charbonnier_loss_ref(x, y, eps=1e-3):
    d = x.astype(jnp.float32) - y.astype(jnp.float32)
    return jnp.mean(jnp.sqrt(d * d + jnp.float32(eps) ** 2))


if __name__ == "__main__":
    key = jax.random.PRNGKey(0)
    kx, ky = jax.random.split(key)

    # 1) Aligned NCHW (numel % 128 == 0): zero-copy reshape, no mask code emitted.
    x = jax.random.normal(kx, (2, 4, 16, 16), dtype=jnp.float32)
    y = jax.random.normal(ky, (2, 4, 16, 16), dtype=jnp.float32)
    loss = jax.block_until_ready(charbonnier_loss(x, y, eps=1e-3))
    ref = charbonnier_loss_ref(x, y, eps=1e-3)
    assert jnp.allclose(loss, ref, rtol=1e-5, atol=1e-6), (loss, ref)

    # 2) Ragged numel (numel % 128 != 0): aligned bulk in-kernel + tiny XLA tail,
    #    ragged last row-tile masked, 2-way core split.
    xr = jax.random.normal(kx, (2, 3, 15, 17), dtype=jnp.float32)
    yr = jax.random.normal(ky, (2, 3, 15, 17), dtype=jnp.float32)
    loss_r = jax.block_until_ready(charbonnier_loss(xr, yr, eps=1e-3))
    ref_r = charbonnier_loss_ref(xr, yr, eps=1e-3)
    assert jnp.allclose(loss_r, ref_r, rtol=1e-5, atol=1e-6), (loss_r, ref_r)

    # 3) Small tile override: odd tile count -> 2-way split with a skipped phantom
    #    step (clamped index_map) plus a ragged last row-tile.
    xs = jax.random.normal(kx, (2, 4, 16, 17), dtype=jnp.float32)
    ys = jax.random.normal(ky, (2, 4, 16, 17), dtype=jnp.float32)
    loss_s = jax.block_until_ready(charbonnier_loss(xs, ys, eps=1e-3, tile_rows=8))
    ref_s = charbonnier_loss_ref(xs, ys, eps=1e-3)
    assert jnp.allclose(loss_s, ref_s, rtol=1e-5, atol=1e-6), (loss_s, ref_s)

    print("KERNEL_OK")
</pallas_src>

<mosaic_0001>
module attributes {stable_mosaic.version = 11 : i64} {
  func.func @_charbonnier_kernel(%arg0: i32, %arg1: i32, %arg2: memref<16x128xf32, #tpu.memory_space<vmem>>, %arg3: memref<16x128xf32, #tpu.memory_space<vmem>>, %arg4: memref<16x128xf32, #tpu.memory_space<vmem>>, %arg5: memref<16x128xf32, #tpu.memory_space<vmem>>) attributes {dimension_semantics = [#tpu.dimension_semantics<parallel>, #tpu.dimension_semantics<arbitrary>], iteration_bounds = array<i64: 1, 1>, scalar_prefetch = 0 : i64, scratch_operands = 1 : i64, tpu.core_type = #tpu.core_type<tc>, window_params = [{transform_indices = @transform_0, window_bounds = array<i64: 16, 128>}, {transform_indices = @transform_1, window_bounds = array<i64: 16, 128>}, {transform_indices = @transform_2, window_bounds = array<i64: 16, 128>}]} {
    %c0_i32 = arith.constant 0 : i32
    %0 = arith.cmpi eq, %arg1, %c0_i32 : i32
    %1 = arith.extui %0 : i1 to i32
    %c0_i32_0 = arith.constant 0 : i32
    %2 = arith.cmpi ne, %1, %c0_i32_0 : i32
    scf.if %2 {
      %cst_11 = arith.constant 0.000000e+00 : f32
      %18 = vector.broadcast %cst_11 : f32 to vector<16x128xf32>
      %c0_12 = arith.constant 0 : index
      %c0_13 = arith.constant 0 : index
      %19 = vector.load %arg5[%c0_12, %c0_13] : memref<16x128xf32, #tpu.memory_space<vmem>>, vector<16x128xf32>
      tpu.vector_store %arg5[%c0_12, %c0_13], %18 {strides = array<i32>} : memref<16x128xf32, #tpu.memory_space<vmem>>, vector<16x128xf32>,
    } else {
    }
    %c0 = arith.constant 0 : index
    %c0_1 = arith.constant 0 : index
    %3 = vector.load %arg2[%c0, %c0_1] : memref<16x128xf32, #tpu.memory_space<vmem>>, vector<16x128xf32>
    %c0_2 = arith.constant 0 : index
    %c0_3 = arith.constant 0 : index
    %4 = vector.load %arg3[%c0_2, %c0_3] : memref<16x128xf32, #tpu.memory_space<vmem>>, vector<16x128xf32>
    %5 = arith.subf %3, %4 : vector<16x128xf32>
    %6 = arith.mulf %5, %5 : vector<16x128xf32>
    %cst = arith.constant 9.99999997E-7 : f32
    %7 = vector.broadcast %cst : f32 to vector<16x128xf32>
    %8 = arith.addf %6, %7 : vector<16x128xf32>
    %9 = math.sqrt %8 : vector<16x128xf32>
    %c0_4 = arith.constant 0 : index
    %c0_5 = arith.constant 0 : index
    %10 = vector.load %arg5[%c0_4, %c0_5] : memref<16x128xf32, #tpu.memory_space<vmem>>, vector<16x128xf32>
    %11 = vector.shape_cast %9 : vector<16x128xf32> to vector<1x16x128xf32>
    %cst_6 = arith.constant dense<0.000000e+00> : vector<16x128xf32>
    %12 = vector.multi_reduction <add>, %11, %cst_6 [0] : vector<1x16x128xf32> to vector<16x128xf32>
    %13 = arith.addf %10, %12 : vector<16x128xf32>
    %c0_7 = arith.constant 0 : index
    %c0_8 = arith.constant 0 : index
    %14 = vector.load %arg5[%c0_7, %c0_8] : memref<16x128xf32, #tpu.memory_space<vmem>>, vector<16x128xf32>
    tpu.vector_store %arg5[%c0_7, %c0_8], %13 {strides = array<i32>} : memref<16x128xf32, #tpu.memory_space<vmem>>, vector<16x128xf32>,
    %c0_i32_9 = arith.constant 0 : i32
    %15 = arith.cmpi eq, %arg1, %c0_i32_9 : i32
    %16 = arith.extui %15 : i1 to i32
    %c0_i32_10 = arith.constant 0 : i32
    %17 = arith.cmpi ne, %16, %c0_i32_10 : i32
    scf.if %17 {
      %c0_11 = arith.constant 0 : index
      %c0_12 = arith.constant 0 : index
      %18 = vector.load %arg5[%c0_11, %c0_12] : memref<16x128xf32, #tpu.memory_space<vmem>>, vector<16x128xf32>
      %c0_13 = arith.constant 0 : index
      %c0_14 = arith.constant 0 : index
      %19 = vector.load %arg4[%c0_13, %c0_14] : memref<16x128xf32, #tpu.memory_space<vmem>>, vector<16x128xf32>
      tpu.vector_store %arg4[%c0_13, %c0_14], %18 {strides = array<i32>} : memref<16x128xf32, #tpu.memory_space<vmem>>, vector<16x128xf32>,
    } else {
    }
    return
  }
  func.func @transform_0(%arg0: i32, %arg1: i32) -> (i32, i32) {
    %c1_i32 = arith.constant 1 : i32
    %0 = arith.muli %arg0, %c1_i32 : i32
    %1 = arith.addi %0, %arg1 : i32
    %c0_i32 = arith.constant 0 : i32
    %c0_i32_0 = arith.constant 0 : i32
    return %1, %c0_i32 : i32, i32
  }
  func.func @transform_1(%arg0: i32, %arg1: i32) -> (i32, i32) {
    %c1_i32 = arith.constant 1 : i32
    %0 = arith.muli %arg0, %c1_i32 : i32
    %1 = arith.addi %0, %arg1 : i32
    %c0_i32 = arith.constant 0 : i32
    %c0_i32_0 = arith.constant 0 : i32
    return %1, %c0_i32 : i32, i32
  }
  func.func @transform_2(%arg0: i32, %arg1: i32) -> (i32, i32) {
    %c0_i32 = arith.constant 0 : i32
    %c0_i32_0 = arith.constant 0 : i32
    return %arg0, %c0_i32 : i32, i32
  }
}

</mosaic_0001>

<llo_original>
// kernel: tpu_custom_call.1
$region0: #{tpu_custom_call.1}
  #allocation0 [shape = 'u32[]', space=smem, size = 0x4, offset = 0x4, fixed_abs, tag = 'smem constant byte address 0x4 - core index']
  #allocation1 [shape = 'u32[144,128]{1,0:T(1,128)}', space=vmem, size = 0x12000, scoped, tag = 'internal scratch']
  #allocation2 [shape = 'f32[16,128]{1,0:T(8,128)}', space=vmem, size = 0x2000, scoped, tag = 'scratch operand']
  %s0 = inlined_call_operand.hbm [shape: f32[16,128], index: 0, kind: input, shape index: {}]
  %s1 = inlined_call_operand.hbm [shape: f32[16,128], index: 1, kind: input, shape index: {}]
  %s2 = inlined_call_operand.hbm [shape: f32[16,128], index: 2, kind: output, shape index: {}]
  %s3 = sld [smem:[#allocation0]]
  $region34: #{tpu_custom_call.1} parent=0
    _
  %s5 = ssub.s32 1, %s3
  %s6 = scalar_select 0, %s5, %s3
  $region1: #{tpu_custom_call.1} parent=0
    #allocation3 [shape = 'u8[8192]{0}', space=vmem, size = 0x2000, scoped, tag = 'input window, operand 0, single buffered']
    #allocation4 [shape = 's32[1]{0}', space=sflag, size = 0x4, scoped, tag = 'scoped memory for tpu_custom_call.1']
    #allocation5 [shape = 's32[1]{0}', space=sflag, size = 0x4, scoped, tag = 'scoped memory for tpu_custom_call.1']
    #allocation6 [shape = 'u8[8192]{0}', space=vmem, size = 0x2000, scoped, tag = 'input window, operand 1, single buffered']
    #allocation7 [shape = 's32[1]{0}', space=sflag, size = 0x4, scoped, tag = 'scoped memory for tpu_custom_call.1']
    #allocation8 [shape = 'u8[8192]{0}', space=vmem, size = 0x2000, scoped, tag = 'output window, operand 0, single buffered']
    %7 = vsyncpa [#allocation4], 0
    %8 = vsyncpa [#allocation7], 0
    %9 = vsyncpa [#allocation5], 0
    // Predicated region
    $region2: #{tpu_custom_call.1} parent=1 // pred_check
      _
    $region3: #{tpu_custom_call.1} parent=1 // pred_check_branch
      %11 = sbr.rel (0) target = $region5
    $region4: #{tpu_custom_call.1} parent=1 // pred_region
      %s12 = sadd.s32 0, 0
      %s13 = smul.u32 2, %s12
      %s15 = ssub.s32 256, 256
      %16 = vsyncadd [#allocation4], %s15
      %s17 = smul.addr %s13, 128
      %s18 = scalar_lea.hbm %s0, %s17
      %s19 = sshll.u32 [#allocation3], 4
      %s20 = int_to_ptr.vmem [resolvable:$true] %s19
      %25 = dma.hbm_to_vmem [thread:$0]  %s18, 256, %s20, [#allocation4], 128, 128, 8
    $region5: #{tpu_custom_call.1} parent=1 // pred_fallthru
      _
    // Predicated region
    $region6: #{tpu_custom_call.1} parent=1 // pred_check
      _
    $region7: #{tpu_custom_call.1} parent=1 // pred_check_branch
      %27 = sbr.rel (0) target = $region9
    $region8: #{tpu_custom_call.1} parent=1 // pred_region
      %s28 = sadd.s32 0, 0
      %s29 = smul.u32 2, %s28
      %s31 = ssub.s32 256, 256
      %32 = vsyncadd [#allocation7], %s31
      %s33 = smul.addr %s29, 128
      %s34 = scalar_lea.hbm %s1, %s33
      %s35 = sshll.u32 [#allocation6], 4
      %s36 = int_to_ptr.vmem [resolvable:$true] %s35
      %41 = dma.hbm_to_vmem [thread:$0]  %s34, 256, %s36, [#allocation7], 128, 128, 8
    $region9: #{tpu_custom_call.1} parent=1 // pred_fallthru
      _
    // Predicated region
    $region10: #{tpu_custom_call.1} parent=1 // pred_check
      _
    $region11: #{tpu_custom_call.1} parent=1 // pred_check_branch
      %43 = sbr.rel (0) target = $region13
    $region12: #{tpu_custom_call.1} parent=1 // pred_region
      %44 = dma.done [#allocation4], 256
    $region13: #{tpu_custom_call.1} parent=1 // pred_fallthru
      _
    // Predicated region
    $region14: #{tpu_custom_call.1} parent=1 // pred_check
      _
    $region15: #{tpu_custom_call.1} parent=1 // pred_check_branch
      %46 = sbr.rel (0) target = $region17
    $region16: #{tpu_custom_call.1} parent=1 // pred_region
      %47 = dma.done [#allocation7], 256
    $region17: #{tpu_custom_call.1} parent=1 // pred_fallthru
      _
    %s48 = sadd.s32 0, 0
    %s49 = smul.u32 2, %s48
    %s50 = sadd.s32 0, 0
    %s51 = smul.u32 2, %s50
    %p52 = scmp.eq.s32.totalorder 0, 0
    // Predicated region
    $region18: #{tpu_custom_call.1} parent=1 // pred_check
      %p53 = pneg %p52
    $region19: #{tpu_custom_call.1} parent=1 // pred_check_branch
      %55 = sbr.rel (%p53) target = $region21
    $region20: #{tpu_custom_call.1} parent=1 // pred_region
      %56 = vst [vmem:[#allocation2] sm:$0xff] 0.0
      %57 = vst [vmem:[#allocation2 + $0x8] sm:$0xff] 0.0
    $region21: #{tpu_custom_call.1} parent=1 // pred_fallthru
      _
    %v58 = vld [vmem:[#allocation3] sm:$0xff]
    %v59 = vld [vmem:[#allocation3 + $0x8] sm:$0xff]
    %v60 = vld [vmem:[#allocation6] sm:$0xff]
    %v61 = vld [vmem:[#allocation6 + $0x8] sm:$0xff]
    %v62 = vsub.f32 %v58, %v60
    %v63 = vsub.f32 %v59, %v61
    %v64 = vmul.f32 %v62, %v62
    %v65 = vmul.f32 %v63, %v63
    %v66 = vadd.f32 %v64, 1e-06
    %v67 = vadd.f32 %v65, 1e-06
    %v68 = vrsqrt.pop %v66
    %v69 = vmul.f32 %v66, %v68
    %vm70 = vcmp.eq.f32.partialorder %v66, inf
    %v71 = vsel %vm70, %v66, %v69
    %vm72 = vcmp.eq.f32.partialorder %v66, 0.0
    %v73 = vand.u32 %v66, 2147483648
    %v74 = vsel %vm72, %v73, %v71
    %v75 = vrsqrt.pop %v67
    %v76 = vmul.f32 %v67, %v75
    %vm77 = vcmp.eq.f32.partialorder %v67, inf
    %v78 = vsel %vm77, %v67, %v76
    %vm79 = vcmp.eq.f32.partialorder %v67, 0.0
    %v80 = vand.u32 %v67, 2147483648
    %v81 = vsel %vm79, %v80, %v78
    %v82 = vld [vmem:[#allocation2] sm:$0xff]
    %v83 = vld [vmem:[#allocation2 + $0x8] sm:$0xff]
    %v84 = vadd.f32 %v74, 0.0
    %v85 = vadd.f32 %v81, 0.0
    %v86 = vadd.f32 %v82, %v84
    %v87 = vadd.f32 %v83, %v85
    %88 = vst [vmem:[#allocation2] sm:$0xff] %v86
    %89 = vst [vmem:[#allocation2 + $0x8] sm:$0xff] %v87
    // Predicated region
    $region22: #{tpu_custom_call.1} parent=1 // pred_check
      %p90 = pneg %p52
    $region23: #{tpu_custom_call.1} parent=1 // pred_check_branch
      %92 = sbr.rel (%p90) target = $region25
    $region24: #{tpu_custom_call.1} parent=1 // pred_region
      %v93 = vld [vmem:[#allocation2] sm:$0xff]
      %v94 = vld [vmem:[#allocation2 + $0x8] sm:$0xff]
      %95 = vst [vmem:[#allocation8] sm:$0xff] %v93
      %96 = vst [vmem:[#allocation8 + $0x8] sm:$0xff] %v94
    $region25: #{tpu_custom_call.1} parent=1 // pred_fallthru
      _
    // Predicated region
    $region26: #{tpu_custom_call.1} parent=1 // pred_check
      _
    $region27: #{tpu_custom_call.1} parent=1 // pred_check_branch
      %98 = sbr.rel (0) target = $region29
    $region28: #{tpu_custom_call.1} parent=1 // pred_region
      %s100 = ssub.s32 256, 256
      %101 = vsyncadd [#allocation5], %s100
      %s102 = sshll.u32 [#allocation8], 4
      %s103 = int_to_ptr.vmem [resolvable:$true] %s102
      %108 = dma.vmem_to_hbm [thread:$0]  %s103, 256, %s2, [#allocation5], 128, 128, 8
    $region29: #{tpu_custom_call.1} parent=1 // pred_fallthru
      _
    // Predicated region
    $region30: #{tpu_custom_call.1} parent=1 // pred_check
      _
    $region31: #{tpu_custom_call.1} parent=1 // pred_check_branch
      %110 = sbr.rel (0) target = $region33
    $region32: #{tpu_custom_call.1} parent=1 // pred_region
      %111 = dma.done [#allocation5], 256
    $region33: #{tpu_custom_call.1} parent=1 // pred_fallthru
      _
    %112 = vsyncpa [#allocation4], 1
    %113 = vsyncpa [#allocation7], 1
    %114 = vsyncpa [#allocation5], 1

</llo_original>
